<compile_context>
chip_gen: v7x
topology: tpu7x:2x2x1
jax: 0.10.0
libtpu: 0.0.40
codegen_flags: <defaults>
</compile_context>

<pallas_src>
import functools

import jax
import jax.numpy as jnp
from jax.experimental import pallas as pl
from jax.experimental.pallas import tpu as pltpu


def pe_add_kernel(x_ref, pe_ref, o_ref, *, batch: int, d_model: int):
    # x_ref, o_ref: (TS, batch * d_model) VMEM tiles (dense 2-D slabs).
    # pe_ref:       (TS, d_model) VMEM tile, shared by every batch element.
    pe = pe_ref[...]
    for b in range(batch):  # static unroll; batch is small (hidden under DMA)
        sl = slice(b * d_model, (b + 1) * d_model)
        o_ref[:, sl] = x_ref[:, sl] + pe


def build_pe(d_model: int, max_seq_len: int, dtype=jnp.float32):
    """Reproduces the PyTorch buffer construction exactly, as [L, d_model].

    The reference divides by (d_model + 1) in the exponent and only
    type-checks for odd d_model (cos gets one fewer column than sin); both
    quirks are matched intentionally.  Build in the model's compute dtype at
    init so no per-call cast is needed (halves pe DMA bytes for bf16).
    """
    assert d_model % 2 == 1, "reference buffer construction requires odd d_model"
    position = jnp.arange(max_seq_len, dtype=jnp.float32)[:, None]            # (L, 1)
    div_term = jnp.exp(
        jnp.arange(0, d_model + 1, 2, dtype=jnp.float32)
        * (-jnp.log(jnp.float32(10000.0)) / (d_model + 1))
    )                                                                          # ((d+1)//2,)
    sin = jnp.sin(position * div_term)                                         # (L, n_even)
    cos = jnp.cos(position * div_term)[:, :-1]                                 # (L, n_odd)
    pe = jnp.zeros((max_seq_len, d_model), jnp.float32)
    pe = pe.at[:, 0::2].set(sin)
    pe = pe.at[:, 1::2].set(cos)
    return pe.astype(dtype)


def _round_up(v: int, m: int) -> int:
    return ((v + m - 1) // m) * m


def _pick_seq_tile(seq_len: int, batch: int, d_model: int, itemsize: int,
                   vmem_budget_bytes: int = 8 << 20, min_steps: int = 4) -> int:
    """Rows per grid step, with lane-padding-aware VMEM accounting.

    Resident VMEM per tile row = x tile + out tile (each round_up(B*D, 128)
    lanes) + pe tile (round_up(D, 128) lanes), all double-buffered (depth-2
    pipeline).  Budget of ~8 MiB keeps every generation (v5e 16 MiB scoped
    default, v6e 32 MiB, v7x 64 MiB/TC) safe without a vmem_limit override.
    Prefers >= min_steps and an even number of roughly equal steps so the
    "parallel" seq axis splits evenly across v7x's two TensorCores.
    """
    if seq_len <= 8:
        return seq_len
    padded_row_bytes = (2 * _round_up(batch * d_model, 128)
                        + _round_up(d_model, 128)) * itemsize
    per_row_vmem = 2 * padded_row_bytes                       # double buffering
    ts_cap = max(8, (vmem_budget_bytes // max(per_row_vmem, 1)) // 8 * 8)

    if seq_len >= min_steps * 8:
        nsteps = max(min_steps, pl.cdiv(seq_len, ts_cap))
        if nsteps % 2:
            nsteps += 1                                        # even split across 2 TCs
        ts = min(ts_cap, _round_up(pl.cdiv(seq_len, nsteps), 8))
    else:
        ts = min(seq_len, ts_cap)
    return max(8, min(ts, seq_len))


@functools.partial(jax.jit, static_argnames=("seq_tile",))
def sincos_pos_encode(x, pe_table, *, seq_tile=None):
    """x: [S, B, D]; pe_table: [max_seq_len, D]. Returns x + pe[:S] (batch broadcast).

    Eval-mode dropout is the identity.  No input/output alias is requested:
    without a real donation (jax.jit(..., donate_argnums=0) at the caller)
    such an alias would force a defensive copy of x and double HBM traffic.
    """
    S, B, D = x.shape
    pe = pe_table[:S]
    if pe.dtype != x.dtype:
        pe = pe.astype(x.dtype)            # fused/elided under jit
    x2 = x.reshape(S, B * D)               # free contiguous collapse -> dense rows

    ts = seq_tile if seq_tile is not None else _pick_seq_tile(
        S, B, D, jnp.dtype(x.dtype).itemsize)

    kernel = functools.partial(pe_add_kernel, batch=B, d_model=D)
    out2 = pl.pallas_call(
        kernel,
        out_shape=jax.ShapeDtypeStruct((S, B * D), x.dtype),
        grid=(pl.cdiv(S, ts),),
        in_specs=[
            pl.BlockSpec((ts, B * D), lambda i: (i, 0)),   # x tile
            pl.BlockSpec((ts, D), lambda i: (i, 0)),       # pe tile
        ],
        out_specs=pl.BlockSpec((ts, B * D), lambda i: (i, 0)),
        compiler_params=pltpu.CompilerParams(
            dimension_semantics=("parallel",),   # v7x: shard seq tiles across both TCs
        ),
    )(x2, pe)
    return out2.reshape(S, B, D)


if __name__ == "__main__":
    key = jax.random.PRNGKey(0)

    # Small shapes consistent with the module: batch=2, d_model=33 (odd,
    # required by the reference buffer construction), seq_len=128.  The auto
    # tile picker chooses 4 even grid steps (ts=32), exercising the pipelined
    # multi-step path even at demo size.
    S, B, D = 128, 2, 33
    MAX_SEQ_LEN = 256
    DROPOUT_P = 0.1  # identity in eval mode

    x = jax.random.normal(key, (S, B, D), dtype=jnp.float32)
    pe_table = build_pe(D, MAX_SEQ_LEN, dtype=x.dtype)   # built in target dtype at init

    # Pure-JAX reference (matches the PyTorch forward in eval mode).
    ref = x + pe_table[:S][:, None, :]

    out = sincos_pos_encode(x, pe_table)
    out = jax.block_until_ready(out)

    assert out.shape == (S, B, D)
    assert jnp.allclose(out, ref, atol=1e-6), "mismatch vs reference"

    print("KERNEL_OK")
</pallas_src>

<mosaic_0001>
module attributes {stable_mosaic.version = 11 : i64} {
  func.func @pe_add_kernel(%arg0: i32, %arg1: memref<32x66xf32, #tpu.memory_space<vmem>>, %arg2: memref<32x33xf32, #tpu.memory_space<vmem>>, %arg3: memref<32x66xf32, #tpu.memory_space<vmem>>) attributes {dimension_semantics = [#tpu.dimension_semantics<parallel>], iteration_bounds = array<i64: 4>, scalar_prefetch = 0 : i64, scratch_operands = 0 : i64, tpu.core_type = #tpu.core_type<tc>, window_params = [{transform_indices = @transform_0, window_bounds = array<i64: 32, 66>}, {transform_indices = @transform_1, window_bounds = array<i64: 32, 33>}, {transform_indices = @transform_2, window_bounds = array<i64: 32, 66>}]} {
    %c0 = arith.constant 0 : index
    %c0_0 = arith.constant 0 : index
    %0 = vector.load %arg2[%c0, %c0_0] : memref<32x33xf32, #tpu.memory_space<vmem>>, vector<32x33xf32>
    %c0_1 = arith.constant 0 : index
    %c0_2 = arith.constant 0 : index
    %1 = vector.load %arg1[%c0_1, %c0_2] : memref<32x66xf32, #tpu.memory_space<vmem>>, vector<32x33xf32>
    %2 = arith.addf %1, %0 : vector<32x33xf32>
    %c0_3 = arith.constant 0 : index
    %c0_4 = arith.constant 0 : index
    %3 = vector.load %arg3[%c0_3, %c0_4] : memref<32x66xf32, #tpu.memory_space<vmem>>, vector<32x33xf32>
    tpu.vector_store %arg3[%c0_3, %c0_4], %2 {strides = array<i32>} : memref<32x66xf32, #tpu.memory_space<vmem>>, vector<32x33xf32>,
    %c0_5 = arith.constant 0 : index
    %c33 = arith.constant 33 : index
    %4 = vector.load %arg1[%c0_5, %c33] : memref<32x66xf32, #tpu.memory_space<vmem>>, vector<32x33xf32>
    %5 = arith.addf %4, %0 : vector<32x33xf32>
    %c0_6 = arith.constant 0 : index
    %c33_7 = arith.constant 33 : index
    %6 = vector.load %arg3[%c0_6, %c33_7] : memref<32x66xf32, #tpu.memory_space<vmem>>, vector<32x33xf32>
    tpu.vector_store %arg3[%c0_6, %c33_7], %5 {strides = array<i32>} : memref<32x66xf32, #tpu.memory_space<vmem>>, vector<32x33xf32>,
    return
  }
  func.func @transform_0(%arg0: i32) -> (i32, i32) {
    %c0_i32 = arith.constant 0 : i32
    %c0_i32_0 = arith.constant 0 : i32
    return %arg0, %c0_i32 : i32, i32
  }
  func.func @transform_1(%arg0: i32) -> (i32, i32) {
    %c0_i32 = arith.constant 0 : i32
    %c0_i32_0 = arith.constant 0 : i32
    return %arg0, %c0_i32 : i32, i32
  }
  func.func @transform_2(%arg0: i32) -> (i32, i32) {
    %c0_i32 = arith.constant 0 : i32
    %c0_i32_0 = arith.constant 0 : i32
    return %arg0, %c0_i32 : i32, i32
  }
}

</mosaic_0001>

<llo_original>
// kernel: sincos_pos_encode.1
$region0: #{sincos_pos_encode.1}
  #allocation0 [shape = 'u32[]', space=smem, size = 0x4, offset = 0x4, fixed_abs, tag = 'smem constant byte address 0x4 - core index']
  #allocation1 [shape = 'u32[144,128]{1,0:T(1,128)}', space=vmem, size = 0x12000, scoped, tag = 'internal scratch']
  %s0 = inlined_call_operand.vmem [shape: f32[128,66], index: 0, kind: input, shape index: {}]
  %s1 = inlined_call_operand.vmem [shape: f32[128,33], index: 1, kind: input, shape index: {}]
  %s2 = inlined_call_operand.vmem [shape: f32[128,66], index: 2, kind: output, shape index: {}]
  %s3 = sld [smem:[#allocation0]]
  $region41: #{sincos_pos_encode.1} parent=0
    _
  %s5 = ssub.s32 1, %s3
  %s6 = scalar_select 0, %s5, %s3
  loop: start=0, step=1, limit=6
  $region2: #{sincos_pos_encode.1} parent=0 // loop_pre_header
    _
  $region3: #{sincos_pos_encode.1} parent=0 // loop_header
    %s8 = sphi 0, %s12
    %p9 = scmp.ge.s32.totalorder %s8, 6
    %s18 = sphi 0, %s20
    %s21 = sphi 0, %s18
    %s22 = sphi 0, %s21
    %s38 = sphi 0, %s22
    %s44 = sphi 0, %s46
    %s47 = sphi 0, %s44
    %s48 = sphi 0, %s47
    %s64 = sphi 0, %s48
    %s70 = sphi 0, %s72
    %s73 = sphi 0, %s70
    %s74 = sphi 0, %s73
    %s90 = sphi 0, %s74
  $region4: #{sincos_pos_encode.1} parent=0 // loop_header_branch
    %11 = sbr.rel (%p9) target = $region8
  $region5: #{sincos_pos_encode.1} parent=0 // loop_body
    %s13 = ssub.s32 %s8, 1
    %s14 = ssub.s32 %s8, 2
    %s15 = sadd.s32 %s8, 1
    %s16 = ssub.s32 %s8, %s15
    %p17 = scmp.eq.s32.totalorder %s16, 0
    %s19 = sadd.s32 %s18, 1
    %s20 = scalar_select %p17, %s18, %s19
    %p23 = pneg %p17
    %p24 = scmp.eq.s32.totalorder %s8, 3
    %p25 = por %p23, %p24
    %p26 = scmp.ne.s32.totalorder %s18, %s21
    %p27 = scmp.eq.s32.totalorder %s8, 0
    %p28 = por %p26, %p27
    %p29 = scmp.ne.s32.totalorder %s18, %s21
    %p30 = scmp.eq.s32.totalorder %s13, 3
    %p31 = por %p29, %p30
    %p32 = scmp.ne.s32.totalorder %s21, %s22
    %p33 = scmp.eq.s32.totalorder %s13, 0
    %p34 = por %p32, %p33
    %p35 = scmp.ne.s32.totalorder %s21, %s22
    %p36 = scmp.eq.s32.totalorder %s14, 3
    %p37 = por %p35, %p36
    %p39 = scmp.ne.s32.totalorder %s22, %s38
    %p40 = scmp.eq.s32.totalorder %s14, 0
    %p41 = por %p39, %p40
    %s42 = ssub.s32 %s8, %s15
    %p43 = scmp.eq.s32.totalorder %s42, 0
    %s45 = sadd.s32 %s44, 1
    %s46 = scalar_select %p43, %s44, %s45
    %p49 = pneg %p43
    %p50 = scmp.eq.s32.totalorder %s8, 3
    %p51 = por %p49, %p50
    %p52 = scmp.ne.s32.totalorder %s44, %s47
    %p53 = scmp.eq.s32.totalorder %s8, 0
    %p54 = por %p52, %p53
    %p55 = scmp.ne.s32.totalorder %s44, %s47
    %p56 = scmp.eq.s32.totalorder %s13, 3
    %p57 = por %p55, %p56
    %p58 = scmp.ne.s32.totalorder %s47, %s48
    %p59 = scmp.eq.s32.totalorder %s13, 0
    %p60 = por %p58, %p59
    %p61 = scmp.ne.s32.totalorder %s47, %s48
    %p62 = scmp.eq.s32.totalorder %s14, 3
    %p63 = por %p61, %p62
    %p65 = scmp.ne.s32.totalorder %s48, %s64
    %p66 = scmp.eq.s32.totalorder %s14, 0
    %p67 = por %p65, %p66
    %s68 = ssub.s32 %s8, %s15
    %p69 = scmp.eq.s32.totalorder %s68, 0
    %s71 = sadd.s32 %s70, 1
    %s72 = scalar_select %p69, %s70, %s71
    %p75 = pneg %p69
    %p76 = scmp.eq.s32.totalorder %s8, 3
    %p77 = por %p75, %p76
    %p78 = scmp.ne.s32.totalorder %s70, %s73
    %p79 = scmp.eq.s32.totalorder %s8, 0
    %p80 = por %p78, %p79
    %p81 = scmp.ne.s32.totalorder %s70, %s73
    %p82 = scmp.eq.s32.totalorder %s13, 3
    %p83 = por %p81, %p82
    %p84 = scmp.ne.s32.totalorder %s73, %s74
    %p85 = scmp.eq.s32.totalorder %s13, 0
    %p86 = por %p84, %p85
    %p87 = scmp.ne.s32.totalorder %s73, %s74
    %p88 = scmp.eq.s32.totalorder %s14, 3
    %p89 = por %p87, %p88
    %p91 = scmp.ne.s32.totalorder %s74, %s90
    %p92 = scmp.eq.s32.totalorder %s14, 0
    %p93 = por %p91, %p92
    %p94 = scmp.le.s32.totalorder 1, %s8
    %p95 = scmp.lt.s32.totalorder %s8, 5
    %p96 = pnand %p94, %p95
    %p97 = pneg %p96
    // Predicated region
    $region9: #{sincos_pos_encode.1} parent=5 // pred_check
      _
    $region10: #{sincos_pos_encode.1} parent=5 // pred_check_branch
      %99 = sbr.rel (%p96) target = $region12
    $region11: #{sincos_pos_encode.1} parent=5 // pred_region
      %s100 = ssub.s32 %s8, 1
    $region12: #{sincos_pos_encode.1} parent=5 // pred_fallthru
      _
    %p101 = scmp.lt.s32.totalorder %s8, 4
    // Predicated region
    $region13: #{sincos_pos_encode.1} parent=5 // pred_check
      %p102 = pneg %p101
    $region14: #{sincos_pos_encode.1} parent=5 // pred_check_branch
      %104 = sbr.rel (%p102) target = $region16
    $region15: #{sincos_pos_encode.1} parent=5 // pred_region
      // Predicated region
      $region17: #{sincos_pos_encode.1} parent=15 // pred_check
        %p105 = pneg %p28
      $region18: #{sincos_pos_encode.1} parent=15 // pred_check_branch
        %107 = sbr.rel (%p105) target = $region20
      $region19: #{sincos_pos_encode.1} parent=15 // pred_region
        %s108 = smul.u32 4, %s8
        %p109 = scmp.lt.s32.totalorder %s108, 15
        %s110 = scalar_select %p109, %s108, 15
        %s111 = smul.addr %s110, 8
        %s112 = scalar_lea.vmem %s0, %s111
        %s113 = smul.u32 4, %s8
      $region20: #{sincos_pos_encode.1} parent=15 // pred_fallthru
        _
      // Predicated region
      $region21: #{sincos_pos_encode.1} parent=15 // pred_check
        %p114 = pneg %p54
      $region22: #{sincos_pos_encode.1} parent=15 // pred_check_branch
        %116 = sbr.rel (%p114) target = $region24
      $region23: #{sincos_pos_encode.1} parent=15 // pred_region
        %s117 = smul.u32 4, %s8
        %p118 = scmp.lt.s32.totalorder %s117, 15
        %s119 = scalar_select %p118, %s117, 15
        %s120 = smul.addr %s119, 8
        %s121 = scalar_lea.vmem %s1, %s120
        %s122 = smul.u32 4, %s8
      $region24: #{sincos_pos_encode.1} parent=15 // pred_fallthru
        _
    $region16: #{sincos_pos_encode.1} parent=5 // pred_fallthru
      _
    %p123 = scmp.le.s32.totalorder 1, %s8
    %p124 = scmp.lt.s32.totalorder %s8, 5
    %p125 = pnand %p123, %p124
    %p126 = pneg %p125
    // Predicated region
    $region25: #{sincos_pos_encode.1} parent=5 // pred_check
      _
    $region26: #{sincos_pos_encode.1} parent=5 // pred_check_branch
      %128 = sbr.rel (%p125) target = $region28
    $region27: #{sincos_pos_encode.1} parent=5 // pred_region
      %s129 = ssub.s32 %s8, 1
      %s130 = smul.u32 4, %s13
      %p131 = scmp.lt.s32.totalorder %s130, 15
      %s132 = scalar_select %p131, %s130, 15
      %s133 = smul.addr %s132, 8
      %s134 = scalar_lea.vmem %s0, %s133
      %p135 = pneg %p34
      %p136 = pneg %p31
      %s137 = smul.u32 4, %s13
      %p138 = scmp.lt.s32.totalorder %s137, 15
      %s139 = scalar_select %p138, %s137, 15
      %s140 = smul.addr %s139, 8
      %s141 = scalar_lea.vmem %s1, %s140
      %p142 = pneg %p60
      %p143 = pneg %p57
      %p144 = pneg %p86
      %p145 = pneg %p83
      %s146 = smul.u32 4, %s13
      %p147 = scmp.lt.s32.totalorder %s146, 15
      %s148 = scalar_select %p147, %s146, 15
      %s149 = smul.addr %s148, 8
      %s150 = scalar_lea.vmem %s2, %s149
      %s151 = smul.u32 4, %s13
      %p152 = scmp.lt.s32.totalorder %s151, 15
      %s153 = scalar_select %p152, %s151, 15
      %s154 = smul.addr %s153, 8
      %s155 = scalar_lea.vmem %s0, %s154
      %s156 = smul.u32 4, %s13
      %s157 = smul.u32 4, %s13
      %p158 = scmp.lt.s32.totalorder %s157, 15
      %s159 = scalar_select %p158, %s157, 15
      %s160 = smul.addr %s159, 8
      %s161 = scalar_lea.vmem %s1, %s160
      %s162 = smul.u32 4, %s13
      %s163 = smul.u32 4, %s13
      %p164 = scmp.lt.s32.totalorder %s163, 15
      %s165 = scalar_select %p164, %s163, 15
      %s166 = smul.addr %s165, 8
      %s167 = scalar_lea.vmem %s2, %s166
      %s168 = smul.u32 4, %s13
      %v169 = vld [vmem:[%s161] sm:$0xff]
      %v170 = vld [vmem:[%s161 + $0x8] sm:$0xff]
      %v171 = vld [vmem:[%s161 + $0x10] sm:$0xff]
      %v172 = vld [vmem:[%s161 + $0x18] sm:$0xff]
      %v173 = vld [vmem:[%s155] sm:$0xff]
      %v174 = vld [vmem:[%s155 + $0x8] sm:$0xff]
      %v175 = vld [vmem:[%s155 + $0x10] sm:$0xff]
      %v176 = vld [vmem:[%s155 + $0x18] sm:$0xff]
      %v177 = vadd.f32 %v173, %v169
      %v178 = vadd.f32 %v174, %v170
      %v179 = vadd.f32 %v175, %v171
      %v180 = vadd.f32 %v176, %v172
      %vm181 = vcmask 269312
      %182 = vst.msk [vmem:[%s167] sm:$0xff] %vm181, %v177
      %183 = vst.msk [vmem:[%s167 + $0x8] sm:$0xff] %vm181, %v178
      %184 = vst.msk [vmem:[%s167 + $0x10] sm:$0xff] %vm181, %v179
      %185 = vst.msk [vmem:[%s167 + $0x18] sm:$0xff] %vm181, %v180
      %v186 = vld [vmem:[%s155] sm:$0xff]
      %v187 = vld [vmem:[%s155 + $0x8] sm:$0xff]
      %v188 = vld [vmem:[%s155 + $0x10] sm:$0xff]
      %v189 = vld [vmem:[%s155 + $0x18] sm:$0xff]
      %194 = vrot.lane.b32.xlu0 %v169, 33
      %v195 = vpop.permute.xlu0 %194
      %196 = vrot.lane.b32.xlu0 %v170, 33
      %v197 = vpop.permute.xlu0 %196
      %198 = vrot.lane.b32.xlu0 %v171, 33
      %v199 = vpop.permute.xlu0 %198
      %200 = vrot.lane.b32.xlu0 %v172, 33
      %v201 = vpop.permute.xlu0 %200
      %v206 = vadd.f32 %v186, %v195
      %v207 = vadd.f32 %v187, %v197
      %v208 = vadd.f32 %v188, %v199
      %v209 = vadd.f32 %v189, %v201
      %vm210 = vcmask 539912
      %211 = vst.msk [vmem:[%s167] sm:$0xff] %vm210, %v206
      %212 = vst.msk [vmem:[%s167 + $0x8] sm:$0xff] %vm210, %v207
      %213 = vst.msk [vmem:[%s167 + $0x10] sm:$0xff] %vm210, %v208
      %214 = vst.msk [vmem:[%s167 + $0x18] sm:$0xff] %vm210, %v209
      %s215 = smul.u32 4, %s13
      %p216 = scmp.lt.s32.totalorder %s215, 15
      %s217 = scalar_select %p216, %s215, 15
      %s218 = smul.addr %s217, 8
      %s219 = scalar_lea.vmem %s2, %s218
      // Predicated region
      $region29: #{sincos_pos_encode.1} parent=27 // pred_check
        %p220 = pneg %p83
      $region30: #{sincos_pos_encode.1} parent=27 // pred_check_branch
        %222 = sbr.rel (%p220) target = $region32
      $region31: #{sincos_pos_encode.1} parent=27 // pred_region
        %s223 = smul.u32 4, %s13
      $region32: #{sincos_pos_encode.1} parent=27 // pred_fallthru
        _
    $region28: #{sincos_pos_encode.1} parent=5 // pred_fallthru
      _
    %p224 = scmp.le.s32.totalorder 2, %s8
    // Predicated region
    $region33: #{sincos_pos_encode.1} parent=5 // pred_check
      %p225 = pneg %p224
    $region34: #{sincos_pos_encode.1} parent=5 // pred_check_branch
      %227 = sbr.rel (%p225) target = $region36
    $region35: #{sincos_pos_encode.1} parent=5 // pred_region
      %s228 = ssub.s32 %s8, 2
      // Predicated region
      $region37: #{sincos_pos_encode.1} parent=35 // pred_check
        %p229 = pneg %p89
      $region38: #{sincos_pos_encode.1} parent=35 // pred_check_branch
        %231 = sbr.rel (%p229) target = $region40
      $region39: #{sincos_pos_encode.1} parent=35 // pred_region
        %s232 = smul.u32 4, %s14
        %p233 = scmp.lt.s32.totalorder %s232, 15
        %s234 = scalar_select %p233, %s232, 15
        %s235 = smul.addr %s234, 8
        %s236 = scalar_lea.vmem %s2, %s235
      $region40: #{sincos_pos_encode.1} parent=35 // pred_fallthru
        _
    $region36: #{sincos_pos_encode.1} parent=5 // pred_fallthru
      _
  $region6: #{sincos_pos_encode.1} parent=0 // loop_footer
    %s12 = sadd.s32 1, %s8
  $region7: #{sincos_pos_encode.1} parent=0 // loop_footer_branch
    %7 = sbr.rel target = $region3
  $region8: #{sincos_pos_encode.1} parent=0 // loop_exit
    _

</llo_original>
